<compile_context>
chip_gen: v6e
topology: v6e:2x2x1
jax: 0.10.0
libtpu: 0.0.40
codegen_flags: <defaults>
</compile_context>

<pallas_src>
import math

import jax
import jax.numpy as jnp
import numpy as np
from jax.experimental import pallas as pl
from jax.experimental.pallas import tpu as pltpu

IN_DIM = 32
OUT_DIM = 32
GRID_SIZE = 5
NUM_BASIS = GRID_SIZE + 1              # 6 Gaussian basis centers per input dim
K_FUSED = (1 + NUM_BASIS) * IN_DIM     # 224 = [SiLU(x) | rbf_0..rbf_5] contraction depth
RBF_C = float((GRID_SIZE + 1) * math.sqrt(math.pi))
NEG_C2 = -(RBF_C * RBF_C)
NOISE_SCALE_BASE = 0.1
DEFAULT_BLOCK_B = 2048                 # batch rows per grid step (sweep 1024..4096)


def kan_linear_g_kernel(x_ref, c_ref, w_ref, o_ref):
    """One batch tile of KANLinearG.

    x_ref : (TB, IN_DIM)             input tile (f32 or bf16)
    c_ref : (1, NUM_BASIS*IN_DIM)    f32 constant RBF-center row (resident)
    w_ref : (K_FUSED, OUT_DIM)       bf16 fused weight [scale_base.T ; basis_0..5] (resident)
    o_ref : (TB, OUT_DIM)            output tile
    """
    x = x_ref[...].astype(jnp.float32)                              # (TB, 32)

    # Base branch: SiLU via EUP exp + approximate EUP reciprocal (keeps the
    # VALU slot, which was the saturating slot, free).
    silu = x * pl.reciprocal(1.0 + jnp.exp(-x), approx=True)        # (TB, 32)

    # Spline branch: Gaussian RBF over 6 lane-replicated copies of x against
    # the precomputed constant center row; -C^2 folded into the argument.
    x_rep = jnp.tile(x, (1, NUM_BASIS))                              # (TB, 192)
    d = x_rep - c_ref[...]                                           # broadcast (1, 192)
    rbf = jnp.exp(d * (d * NEG_C2))                                  # (TB, 192)

    # Fused feature slab and single MXU matmul (bf16 operands, f32 accumulate).
    feats = jnp.concatenate([silu, rbf], axis=-1)                    # (TB, 224)
    o_ref[...] = jnp.dot(feats.astype(jnp.bfloat16), w_ref[...],
                         preferred_element_type=jnp.float32).astype(o_ref.dtype)


def _round_up(n, m):
    return -(-n // m) * m


def _fused_weight(scale_base, coeff, scale_spline):
    """(K_FUSED, OUT_DIM) bf16 fused weight matching the kernel's slab layout."""
    ss = jnp.asarray(scale_spline, jnp.float32)
    if ss.ndim == 2:                                          # per-(out,in) scale_spline
        ss = ss[:, :, None]
    cw = coeff.astype(jnp.float32) * ss                       # (OUT, IN, NB)
    wb = scale_base.astype(jnp.float32).T[None]               # (1, IN, OUT)
    ws = jnp.transpose(cw, (2, 1, 0))                         # (NB, IN, OUT)
    w = jnp.concatenate([wb, ws], axis=0)                     # (1+NB, IN, OUT)
    return w.reshape(K_FUSED, OUT_DIM).astype(jnp.bfloat16)


def _center_row():
    """(1, NUM_BASIS*IN_DIM) f32 constant: center j/grid_size repeated per input dim."""
    g = np.repeat(np.arange(NUM_BASIS, dtype=np.float32) / GRID_SIZE, IN_DIM)
    return jnp.asarray(g.reshape(1, NUM_BASIS * IN_DIM))


def kan_linear_g(x, scale_base, coeff, scale_spline, *, block_b=DEFAULT_BLOCK_B):
    """x: (..., IN_DIM) -> (..., OUT_DIM)."""
    assert x.shape[-1] == IN_DIM
    lead_shape = x.shape[:-1]

    # HBM I/O dtype follows the input (bf16 stays bf16); math is f32 in-kernel.
    io_dtype = x.dtype if x.dtype in (jnp.dtype(jnp.bfloat16), jnp.dtype(jnp.float32)) \
        else jnp.dtype(jnp.float32)
    xf = x.reshape(-1, IN_DIM).astype(io_dtype)
    b = xf.shape[0]
    if b == 0:                                                # degenerate batch
        return jnp.zeros((*lead_shape, OUT_DIM), io_dtype)

    # Tile selection: as large as block_b, but capped at ceil(b/2) so the grid
    # has >= 2 steps whenever there is more than one 8-row tile of work
    # (both v7x TensorCores get work); always a multiple of 8 sublanes.
    block_b = max(8, _round_up(block_b, 8))
    if b <= 8:
        tb = 8
    else:
        tb = max(8, min(block_b, _round_up(-(-b // 2), 8)))
    bp = _round_up(b, tb)
    if bp != b:
        xf = jnp.pad(xf, ((0, bp - b), (0, 0)))

    w = _fused_weight(scale_base, coeff, scale_spline)        # (224, 32) bf16
    centers = _center_row()                                   # (1, 192) f32

    out = pl.pallas_call(
        kan_linear_g_kernel,
        out_shape=jax.ShapeDtypeStruct((bp, OUT_DIM), io_dtype),
        grid=(bp // tb,),
        in_specs=[
            pl.BlockSpec((tb, IN_DIM), lambda i: (i, 0)),
            pl.BlockSpec((1, NUM_BASIS * IN_DIM), lambda i: (0, 0)),   # resident centers
            pl.BlockSpec((K_FUSED, OUT_DIM), lambda i: (0, 0)),        # resident weight
        ],
        out_specs=pl.BlockSpec((tb, OUT_DIM), lambda i: (i, 0)),
        compiler_params=pltpu.CompilerParams(
            dimension_semantics=("parallel",),
            # 48 MiB: enough headroom for block_b up to ~4096 while staying
            # under v7x's 64 MiB physical VMEM.
            vmem_limit_bytes=48 * 1024 * 1024,
        ),
    )(xf, centers, w)

    return out[:b].reshape(*lead_shape, OUT_DIM)


# ----------------------------- references -----------------------------------

def kan_linear_g_reference(x, scale_base, coeff, scale_spline):
    """Pure-f32 reference matching the (fixed-up) module forward."""
    lead_shape = x.shape[:-1]
    xf = x.reshape(-1, IN_DIM).astype(jnp.float32)
    g = jnp.arange(NUM_BASIS, dtype=jnp.float32) / GRID_SIZE
    phi = jnp.exp(-jnp.square((xf[:, :, None] - g[None, None, :]) * RBF_C))  # (B, IN, NB)
    ss = jnp.asarray(scale_spline, jnp.float32)
    if ss.ndim == 2:
        ss = ss[:, :, None]
    cw = coeff.astype(jnp.float32) * ss                                       # (OUT, IN, NB)
    y = (jax.nn.silu(xf) @ scale_base.astype(jnp.float32).T
         + phi.reshape(xf.shape[0], -1) @ cw.reshape(OUT_DIM, -1).T)
    return y.reshape(*lead_shape, OUT_DIM)


def kan_linear_g_bf16_matched(x, w_fused):
    """Reference using the kernel's fused-weight layout and bf16 MXU rounding."""
    lead_shape = x.shape[:-1]
    xf = x.reshape(-1, IN_DIM).astype(jnp.float32)
    silu = xf * (1.0 / (1.0 + jnp.exp(-xf)))
    g = jnp.arange(NUM_BASIS, dtype=jnp.float32) / GRID_SIZE
    phi = jnp.exp(-jnp.square((xf[:, None, :] - g[None, :, None]) * RBF_C))   # (B, NB, IN)
    feats = jnp.concatenate([silu, phi.reshape(xf.shape[0], -1)], axis=-1)    # (B, 224)
    feats = feats.astype(jnp.bfloat16).astype(jnp.float32)
    return (feats @ w_fused.astype(jnp.float32)).reshape(*lead_shape, OUT_DIM)


# ------------------------------- demo / test ---------------------------------

if __name__ == "__main__":
    key = jax.random.PRNGKey(0)
    k_x, k_sb, k_coeff = jax.random.split(key, 3)

    # Deterministic parameter init mirroring the module's __init__ shapes.
    scale_base = (1.0 / math.sqrt(IN_DIM)
                  + (jax.random.normal(k_sb, (OUT_DIM, IN_DIM), jnp.float32) * 2.0 - 1.0)
                  * NOISE_SCALE_BASE)
    coeff = jax.random.uniform(k_coeff, (OUT_DIM, IN_DIM, NUM_BASIS), jnp.float32)
    scale_spline = jnp.float32(1.0)   # default buffer [1.0]; bias=False by default

    # Input: (batch=2, seq=8, in_dim=32) -> 16 rows -> 2 grid steps of 8 rows.
    x = jax.random.normal(k_x, (2, 8, IN_DIM), jnp.float32)

    y = jax.block_until_ready(kan_linear_g(x, scale_base, coeff, scale_spline))

    # Structural check against a reference with the kernel's exact fused-weight
    # layout and bf16 MXU-operand rounding (slack covers the approx reciprocal).
    w_fused = _fused_weight(scale_base, coeff, scale_spline)
    y_m = kan_linear_g_bf16_matched(x, w_fused)
    np.testing.assert_allclose(np.asarray(y), np.asarray(y_m), rtol=2e-2, atol=2e-2)

    # Semantic check against the pure-f32 module forward; tolerance accounts for
    # bf16 MXU operands and the approximate EUP reciprocal in SiLU.
    y_ref = kan_linear_g_reference(x, scale_base, coeff, scale_spline)
    np.testing.assert_allclose(np.asarray(y), np.asarray(y_ref), rtol=5e-2, atol=1e-1)

    print("KERNEL_OK")
</pallas_src>

<mosaic_0001>
module attributes {stable_mosaic.version = 11 : i64} {
  func.func @kan_linear_g_kernel(%arg0: i32, %arg1: memref<8x32xf32, #tpu.memory_space<vmem>>, %arg2: memref<1x192xf32, #tpu.memory_space<vmem>>, %arg3: memref<224x32xbf16, #tpu.memory_space<vmem>>, %arg4: memref<8x32xf32, #tpu.memory_space<vmem>>) attributes {dimension_semantics = [#tpu.dimension_semantics<parallel>], iteration_bounds = array<i64: 2>, scalar_prefetch = 0 : i64, scratch_operands = 0 : i64, tpu.core_type = #tpu.core_type<tc>, window_params = [{transform_indices = @transform_0, window_bounds = array<i64: 8, 32>}, {pipeline_mode = #tpu.pipeline_mode<synchronous>, transform_indices = @transform_1, window_bounds = array<i64: 1, 192>}, {pipeline_mode = #tpu.pipeline_mode<synchronous>, transform_indices = @transform_2, window_bounds = array<i64: 224, 32>}, {transform_indices = @transform_3, window_bounds = array<i64: 8, 32>}]} {
    %c0 = arith.constant 0 : index
    %c0_0 = arith.constant 0 : index
    %0 = vector.load %arg1[%c0, %c0_0] : memref<8x32xf32, #tpu.memory_space<vmem>>, vector<8x32xf32>
    %cst = arith.constant 0.000000e+00 : f32
    %1 = vector.broadcast %cst : f32 to vector<8x32xf32>
    %2 = arith.subf %1, %0 : vector<8x32xf32>
    %3 = math.exp %2 : vector<8x32xf32>
    %cst_1 = arith.constant 1.000000e+00 : f32
    %4 = vector.broadcast %cst_1 : f32 to vector<8x32xf32>
    %5 = arith.addf %4, %3 : vector<8x32xf32>
    %6 = tpu.reciprocal %5 {approx = true} : vector<8x32xf32> -> vector<8x32xf32>
    %7 = arith.mulf %0, %6 : vector<8x32xf32>
    %8 = tpu.concatenate %0, %0, %0, %0, %0, %0 in 1 : vector<8x32xf32>, vector<8x32xf32>, vector<8x32xf32>, vector<8x32xf32>, vector<8x32xf32>, vector<8x32xf32> -> vector<8x192xf32>
    %c0_2 = arith.constant 0 : index
    %c0_3 = arith.constant 0 : index
    %9 = vector.load %arg2[%c0_2, %c0_3] : memref<1x192xf32, #tpu.memory_space<vmem>>, vector<1x192xf32>
    %10 = vector.broadcast %9 : vector<1x192xf32> to vector<8x192xf32>
    %11 = arith.subf %8, %10 : vector<8x192xf32>
    %cst_4 = arith.constant -113.097336 : f32
    %12 = vector.broadcast %cst_4 : f32 to vector<8x192xf32>
    %13 = arith.mulf %11, %12 : vector<8x192xf32>
    %14 = arith.mulf %11, %13 : vector<8x192xf32>
    %15 = math.exp %14 : vector<8x192xf32>
    %16 = tpu.concatenate %7, %15 in 1 : vector<8x32xf32>, vector<8x192xf32> -> vector<8x224xf32>
    %17 = arith.truncf %16 : vector<8x224xf32> to vector<8x224xbf16>
    %c0_5 = arith.constant 0 : index
    %c0_6 = arith.constant 0 : index
    %18 = vector.load %arg3[%c0_5, %c0_6] : memref<224x32xbf16, #tpu.memory_space<vmem>>, vector<224x32xbf16>
    %cst_7 = arith.constant dense<0.000000e+00> : vector<8x32xf32>
    %19 = tpu.matmul %17, %18, %cst_7 {dimension_numbers = #tpu.dot_dimension_numbers<[1], [0], [0], [1], [0, 0, 1, 1], [], []>} : vector<8x224xbf16>, vector<224x32xbf16>, vector<8x32xf32> -> vector<8x32xf32>
    %c0_8 = arith.constant 0 : index
    %c0_9 = arith.constant 0 : index
    %20 = vector.load %arg4[%c0_8, %c0_9] : memref<8x32xf32, #tpu.memory_space<vmem>>, vector<8x32xf32>
    tpu.vector_store %arg4[%c0_8, %c0_9], %19 {strides = array<i32>} : memref<8x32xf32, #tpu.memory_space<vmem>>, vector<8x32xf32>,
    return
  }
  func.func @transform_0(%arg0: i32) -> (i32, i32) {
    %c0_i32 = arith.constant 0 : i32
    %c0_i32_0 = arith.constant 0 : i32
    return %arg0, %c0_i32 : i32, i32
  }
  func.func @transform_1(%arg0: i32) -> (i32, i32) {
    %c0_i32 = arith.constant 0 : i32
    %c0_i32_0 = arith.constant 0 : i32
    %c0_i32_1 = arith.constant 0 : i32
    return %c0_i32, %c0_i32_0 : i32, i32
  }
  func.func @transform_2(%arg0: i32) -> (i32, i32) {
    %c0_i32 = arith.constant 0 : i32
    %c0_i32_0 = arith.constant 0 : i32
    %c0_i32_1 = arith.constant 0 : i32
    return %c0_i32, %c0_i32_0 : i32, i32
  }
  func.func @transform_3(%arg0: i32) -> (i32, i32) {
    %c0_i32 = arith.constant 0 : i32
    %c0_i32_0 = arith.constant 0 : i32
    return %arg0, %c0_i32 : i32, i32
  }
}

</mosaic_0001>

<llo_original>
// kernel: tpu_custom_call.1
$region0: #{tpu_custom_call.1}
  #allocation0 [shape = 'u32[]', space=smem, size = 0x4, offset = 0x4, fixed_abs, tag = 'smem constant byte address 0x4 - core index']
  #allocation1 [shape = 'u32[144,128]{1,0:T(1,128)}', space=vmem, size = 0x12000, scoped, tag = 'internal scratch']
  %s0 = inlined_call_operand.vmem [shape: f32[16,32], index: 0, kind: input, shape index: {}]
  %s1 = inlined_call_operand.vmem [shape: f32[1,192], index: 1, kind: input, shape index: {}]
  %s2 = inlined_call_operand.vmem [shape: bf16[224,32], index: 2, kind: input, shape index: {}]
  %s3 = inlined_call_operand.hbm [shape: f32[16,32], index: 3, kind: output, shape index: {}]
  %s4 = sld [smem:[#allocation0]]
  $region45: #{tpu_custom_call.1} parent=0
    _
  %s6 = ssub.s32 1, %s4
  %s7 = scalar_select 0, %s6, %s4
  $region1: #{tpu_custom_call.1} parent=0
    #allocation2 [shape = 'u8[8192]{0}', space=vmem, size = 0x2000, scoped, tag = 'output window, operand 0']
    #allocation3 [shape = 's32[2]{0}', space=sflag, size = 0x8, scoped, tag = 'scoped memory for tpu_custom_call.1']
    %8 = vsyncpa [#allocation3], 0
    %s9 = scalar_lea.sflag [#allocation3], 1
    %10 = vsyncpa %s9, 0
    loop: start=0, step=1, limit=4
    $region2: #{tpu_custom_call.1} parent=1 // loop_pre_header
      _
    $region3: #{tpu_custom_call.1} parent=1 // loop_header
      %s12 = sphi 0, %s16
      %p13 = scmp.ge.s32.totalorder %s12, 4
      %s22 = sphi 0, %s24
      %s25 = sphi 0, %s22
      %s26 = sphi 0, %s25
      %s42 = sphi 0, %s26
      %s46 = sphi 0, %s46
      %s48 = sphi 0, %s46
      %s49 = sphi 0, %s48
      %s63 = sphi 0, %s49
      %s67 = sphi 0, %s67
      %s69 = sphi 0, %s67
      %s70 = sphi 0, %s69
      %s84 = sphi 0, %s70
      %s90 = sphi 0, %s92
      %s93 = sphi 0, %s90
      %s94 = sphi 0, %s93
      %s110 = sphi 0, %s94
    $region4: #{tpu_custom_call.1} parent=1 // loop_header_branch
      %15 = sbr.rel (%p13) target = $region8
    $region5: #{tpu_custom_call.1} parent=1 // loop_body
      %s17 = ssub.s32 %s12, 1
      %s18 = ssub.s32 %s12, 2
      %s19 = sadd.s32 %s12, 1
      %s20 = ssub.s32 %s12, %s19
      %p21 = scmp.eq.s32.totalorder %s20, 0
      %s23 = sadd.s32 %s22, 1
      %s24 = scalar_select %p21, %s22, %s23
      %p27 = pneg %p21
      %p28 = scmp.eq.s32.totalorder %s12, 1
      %p29 = por %p27, %p28
      %p30 = scmp.ne.s32.totalorder %s22, %s25
      %p31 = scmp.eq.s32.totalorder %s12, 0
      %p32 = por %p30, %p31
      %p33 = scmp.ne.s32.totalorder %s22, %s25
      %p34 = scmp.eq.s32.totalorder %s17, 1
      %p35 = por %p33, %p34
      %p36 = scmp.ne.s32.totalorder %s25, %s26
      %p37 = scmp.eq.s32.totalorder %s17, 0
      %p38 = por %p36, %p37
      %p39 = scmp.ne.s32.totalorder %s25, %s26
      %p40 = scmp.eq.s32.totalorder %s18, 1
      %p41 = por %p39, %p40
      %p43 = scmp.ne.s32.totalorder %s26, %s42
      %p44 = scmp.eq.s32.totalorder %s18, 0
      %p45 = por %p43, %p44
      %s47 = sadd.s32 %s46, 1
      %p50 = scmp.eq.s32.totalorder %s12, 1
      %p51 = scmp.ne.s32.totalorder %s46, %s48
      %p52 = scmp.eq.s32.totalorder %s12, 0
      %p53 = por %p51, %p52
      %p54 = scmp.ne.s32.totalorder %s46, %s48
      %p55 = scmp.eq.s32.totalorder %s17, 1
      %p56 = por %p54, %p55
      %p57 = scmp.ne.s32.totalorder %s48, %s49
      %p58 = scmp.eq.s32.totalorder %s17, 0
      %p59 = por %p57, %p58
      %p60 = scmp.ne.s32.totalorder %s48, %s49
      %p61 = scmp.eq.s32.totalorder %s18, 1
      %p62 = por %p60, %p61
      %p64 = scmp.ne.s32.totalorder %s49, %s63
      %p65 = scmp.eq.s32.totalorder %s18, 0
      %p66 = por %p64, %p65
      %s68 = sadd.s32 %s67, 1
      %p71 = scmp.eq.s32.totalorder %s12, 1
      %p72 = scmp.ne.s32.totalorder %s67, %s69
      %p73 = scmp.eq.s32.totalorder %s12, 0
      %p74 = por %p72, %p73
      %p75 = scmp.ne.s32.totalorder %s67, %s69
      %p76 = scmp.eq.s32.totalorder %s17, 1
      %p77 = por %p75, %p76
      %p78 = scmp.ne.s32.totalorder %s69, %s70
      %p79 = scmp.eq.s32.totalorder %s17, 0
      %p80 = por %p78, %p79
      %p81 = scmp.ne.s32.totalorder %s69, %s70
      %p82 = scmp.eq.s32.totalorder %s18, 1
      %p83 = por %p81, %p82
      %p85 = scmp.ne.s32.totalorder %s70, %s84
      %p86 = scmp.eq.s32.totalorder %s18, 0
      %p87 = por %p85, %p86
      %s88 = ssub.s32 %s12, %s19
      %p89 = scmp.eq.s32.totalorder %s88, 0
      %s91 = sadd.s32 %s90, 1
      %s92 = scalar_select %p89, %s90, %s91
      %p95 = pneg %p89
      %p96 = scmp.eq.s32.totalorder %s12, 1
      %p97 = por %p95, %p96
      %p98 = scmp.ne.s32.totalorder %s90, %s93
      %p99 = scmp.eq.s32.totalorder %s12, 0
      %p100 = por %p98, %p99
      %p101 = scmp.ne.s32.totalorder %s90, %s93
      %p102 = scmp.eq.s32.totalorder %s17, 1
      %p103 = por %p101, %p102
      %p104 = scmp.ne.s32.totalorder %s93, %s94
      %p105 = scmp.eq.s32.totalorder %s17, 0
      %p106 = por %p104, %p105
      %p107 = scmp.ne.s32.totalorder %s93, %s94
      %p108 = scmp.eq.s32.totalorder %s18, 1
      %p109 = por %p107, %p108
      %p111 = scmp.ne.s32.totalorder %s94, %s110
      %p112 = scmp.eq.s32.totalorder %s18, 0
      %p113 = por %p111, %p112
      %p114 = scmp.le.s32.totalorder 1, %s12
      %p115 = scmp.lt.s32.totalorder %s12, 3
      %p116 = pnand %p114, %p115
      %p117 = pneg %p116
      // Predicated region
      $region9: #{tpu_custom_call.1} parent=5 // pred_check
        _
      $region10: #{tpu_custom_call.1} parent=5 // pred_check_branch
        %119 = sbr.rel (%p116) target = $region12
      $region11: #{tpu_custom_call.1} parent=5 // pred_region
        %s120 = ssub.s32 %s12, 1
        // Predicated region
        $region13: #{tpu_custom_call.1} parent=11 // pred_check
          %p121 = pneg %p59
        $region14: #{tpu_custom_call.1} parent=11 // pred_check_branch
          %123 = sbr.rel (%p121) target = $region16
        $region15: #{tpu_custom_call.1} parent=11 // pred_region
          _
        $region16: #{tpu_custom_call.1} parent=11 // pred_fallthru
          _
        // Predicated region
        $region17: #{tpu_custom_call.1} parent=11 // pred_check
          %p124 = pneg %p80
        $region18: #{tpu_custom_call.1} parent=11 // pred_check_branch
          %126 = sbr.rel (%p124) target = $region20
        $region19: #{tpu_custom_call.1} parent=11 // pred_region
          _
        $region20: #{tpu_custom_call.1} parent=11 // pred_fallthru
          _
      $region12: #{tpu_custom_call.1} parent=5 // pred_fallthru
        _
      %p127 = scmp.lt.s32.totalorder %s12, 2
      // Predicated region
      $region21: #{tpu_custom_call.1} parent=5 // pred_check
        %p128 = pneg %p127
      $region22: #{tpu_custom_call.1} parent=5 // pred_check_branch
        %130 = sbr.rel (%p128) target = $region24
      $region23: #{tpu_custom_call.1} parent=5 // pred_region
        // Predicated region
        $region25: #{tpu_custom_call.1} parent=23 // pred_check
          %p131 = pneg %p32
        $region26: #{tpu_custom_call.1} parent=23 // pred_check_branch
          %133 = sbr.rel (%p131) target = $region28
        $region27: #{tpu_custom_call.1} parent=23 // pred_region
          %p134 = scmp.lt.s32.totalorder %s12, 1
          %s135 = scalar_select %p134, %s12, 1
          %s136 = smul.addr %s135, 8
          %s137 = scalar_lea.vmem %s0, %s136
        $region28: #{tpu_custom_call.1} parent=23 // pred_fallthru
          _
      $region24: #{tpu_custom_call.1} parent=5 // pred_fallthru
        _
      %p138 = scmp.le.s32.totalorder 1, %s12
      %p139 = scmp.lt.s32.totalorder %s12, 3
      %p140 = pnand %p138, %p139
      %p141 = pneg %p140
      // Predicated region
      $region29: #{tpu_custom_call.1} parent=5 // pred_check
        _
      $region30: #{tpu_custom_call.1} parent=5 // pred_check_branch
        %143 = sbr.rel (%p140) target = $region32
      $region31: #{tpu_custom_call.1} parent=5 // pred_region
        %s144 = ssub.s32 %s12, 1
        %p145 = scmp.lt.s32.totalorder %s17, 1
        %s146 = scalar_select %p145, %s17, 1
        %s147 = smul.addr %s146, 8
        %s148 = scalar_lea.vmem %s0, %s147
        %p149 = pneg %p38
        %p150 = pneg %p35
        %p151 = pneg %p59
        %p152 = pneg %p56
        %p153 = pneg %p80
        %p154 = pneg %p77
        %p155 = pneg %p106
        %p156 = pneg %p103
        %s157 = sand.u32 %s93, 1
        %s158 = scalar_lea.sflag [#allocation3], %s157
        %s159 = sand.u32 %s93, 1
        %s160 = smul.addr %s159, 8
        %s161 = scalar_lea.vmem [#allocation2], %s160
        %p162 = scmp.lt.s32.totalorder %s17, 1
        %s163 = scalar_select %p162, %s17, 1
        %s164 = smul.addr %s163, 8
        %s165 = scalar_lea.vmem %s0, %s164
        %v167 = vld [vmem:[%s165] sm:$0xff]
        %v168 = vsub.f32 0.0, %v167
        %v169 = vmul.f32 %v168, 1.442695
        %v170 = vpow.pop %v169
        %v171 = vadd.f32 %v170, 1.0
        %v172 = vrcp.pop %v171
        %v173 = vmul.f32 %v167, %v172
        %175 = vrot.lane.b32.xlu0 %v167, 32
        %v176 = vpop.permute.xlu0 %175
        %178 = vrot.lane.b32.xlu0 %v167, 64
        %v179 = vpop.permute.xlu0 %178
        %181 = vrot.lane.b32.xlu0 %v167, 96
        %v182 = vpop.permute.xlu0 %181
        %vm184 = vcmask 261120
        %v185 = vsel %vm184, %v167, %v176
        %vm186 = vcmask 523264
        %v187 = vsel %vm186, %v185, %v179
        %vm188 = vcmask 785408
        %v189 = vsel %vm188, %v187, %v182
        %v190 = vld [vmem:[%s1] sm:$0x3]
        %v192 = vlaneseq
        %v193 = vshrl.u32 %v192, 7
        %v194 = vsub.s32 0, %v193
        %v195 = vrot.slane %v190, %v194
        %v196 = vlaneseq
        %v197 = vshrl.u32 %v196, 7
        %v198 = vsub.s32 1, %v197
        %v199 = vrot.slane %v190, %v198
        %v202 = vsub.f32 %v189, %v195
        %v203 = vsub.f32 %v185, %v199
        %v204 = vmul.f32 %v202, -113.097336
        %v205 = vmul.f32 %v203, -113.097336
        %v206 = vmul.f32 %v202, %v204
        %v207 = vmul.f32 %v203, %v205
        %v208 = vmul.f32 %v206, 1.442695
        %v209 = vpow.pop %v208
        %v210 = vmul.f32 %v207, 1.442695
        %v211 = vpow.pop %v210
        %214 = vrot.lane.b32.xlu0 %v209, 32
        %v215 = vpop.permute.xlu0 %214
        %216 = vrot.lane.b32.xlu0 %v211, 32
        %v217 = vpop.permute.xlu0 %216
        %v218 = vsel %vm184, %v215, %v217
        %v221 = vsel %vm184, %v173, %v215
        %v222 = vpack.c.bf16 %v221, %v221
        %v223 = vpack.c.bf16 %v218, %v218
        %v224 = vld [vmem:[%s2] sm:$0xf]
        %v225 = vld [vmem:[%s2 + $0x4] sm:$0xf]
        %v226 = vld [vmem:[%s2 + $0x8] sm:$0xf]
        %v227 = vld [vmem:[%s2 + $0xc] sm:$0xf]
        %v228 = vld [vmem:[%s2 + $0x10] sm:$0xf]
        %v229 = vld [vmem:[%s2 + $0x14] sm:$0xf]
        %v230 = vld [vmem:[%s2 + $0x18] sm:$0xf]
        %v231 = vld [vmem:[%s2 + $0x1c] sm:$0xf]
        %v232 = vld [vmem:[%s2 + $0x20] sm:$0xf]
        %v233 = vld [vmem:[%s2 + $0x24] sm:$0xf]
        %v234 = vld [vmem:[%s2 + $0x28] sm:$0xf]
        %v235 = vld [vmem:[%s2 + $0x2c] sm:$0xf]
        %v236 = vld [vmem:[%s2 + $0x30] sm:$0xf]
        %v237 = vld [vmem:[%s2 + $0x34] sm:$0xf]
        %v238 = vld [vmem:[%s2 + $0x38] sm:$0xf]
        %v239 = vld [vmem:[%s2 + $0x3c] sm:$0xf]
        %v240 = vld [vmem:[%s2 + $0x40] sm:$0xf]
        %v241 = vld [vmem:[%s2 + $0x44] sm:$0xf]
        %v242 = vld [vmem:[%s2 + $0x48] sm:$0xf]
        %v243 = vld [vmem:[%s2 + $0x4c] sm:$0xf]
        %v244 = vld [vmem:[%s2 + $0x50] sm:$0xf]
        %v245 = vld [vmem:[%s2 + $0x54] sm:$0xf]
        %v246 = vld [vmem:[%s2 + $0x58] sm:$0xf]
        %v247 = vld [vmem:[%s2 + $0x5c] sm:$0xf]
        %v248 = vld [vmem:[%s2 + $0x60] sm:$0xf]
        %v249 = vld [vmem:[%s2 + $0x64] sm:$0xf]
        %v250 = vld [vmem:[%s2 + $0x68] sm:$0xf]
        %v251 = vld [vmem:[%s2 + $0x6c] sm:$0xf]
        %v280 = vunpack.c.l.b16 %v224
        %v281 = vunpack.c.l.b16 %v225
        %v282 = vunpack.c.l.b16 %v226
        %v283 = vunpack.c.l.b16 %v227
        %v284 = vunpack.c.l.b16 %v228
        %v285 = vunpack.c.l.b16 %v229
        %v286 = vunpack.c.l.b16 %v230
        %v287 = vunpack.c.l.b16 %v231
        %v288 = vunpack.c.l.b16 %v232
        %v289 = vunpack.c.l.b16 %v233
        %v290 = vunpack.c.l.b16 %v234
        %v291 = vunpack.c.l.b16 %v235
        %v292 = vunpack.c.l.b16 %v236
        %v293 = vunpack.c.l.b16 %v237
        %v294 = vunpack.c.l.b16 %v238
        %v295 = vunpack.c.l.b16 %v239
        %v296 = vunpack.c.l.b16 %v240
        %v297 = vunpack.c.l.b16 %v241
        %v298 = vunpack.c.l.b16 %v242
        %v299 = vunpack.c.l.b16 %v243
        %v300 = vunpack.c.l.b16 %v244
        %v301 = vunpack.c.l.b16 %v245
        %v302 = vunpack.c.l.b16 %v246
        %v303 = vunpack.c.l.b16 %v247
        %v304 = vunpack.c.l.b16 %v248
        %v305 = vunpack.c.l.b16 %v249
        %v306 = vunpack.c.l.b16 %v250
        %v307 = vunpack.c.l.b16 %v251
        %v308 = vpack.c.b16 %v281, %v280
        %v309 = vpack.c.b16 %v283, %v282
        %v310 = vpack.c.b16 %v285, %v284
        %v311 = vpack.c.b16 %v287, %v286
        %v312 = vpack.c.b16 %v289, %v288
        %v313 = vpack.c.b16 %v291, %v290
        %v314 = vpack.c.b16 %v293, %v292
        %v315 = vpack.c.b16 %v295, %v294
        %v316 = vpack.c.b16 %v297, %v296
        %v317 = vpack.c.b16 %v299, %v298
        %v318 = vpack.c.b16 %v301, %v300
        %v319 = vpack.c.b16 %v303, %v302
        %v320 = vpack.c.b16 %v305, %v304
        %v321 = vpack.c.b16 %v307, %v306
        %v337 = vsel %vm188, %v223, 0
        %339 = vmatprep.subr.bf16.mxu0 0
        %340 = vmatpush1.bf16.msra.mxu0 %v315
        %341 = vmatprep.subr.bf16.mxu0 0
        %342 = vmatpush1.bf16.msra.mxu0 %v314
        %343 = vmatprep.subr.bf16.mxu0 0
        %344 = vmatpush1.bf16.msra.mxu0 %v313
        %345 = vmatprep.subr.bf16.mxu0 0
        %346 = vmatpush1.bf16.msra.mxu0 %v312
        %347 = vmatprep.subr.bf16.mxu0 0
        %348 = vmatpush1.bf16.msra.mxu0 %v311
        %349 = vmatprep.subr.bf16.mxu0 0
        %350 = vmatpush1.bf16.msra.mxu0 %v310
        %351 = vmatprep.subr.bf16.mxu0 0
        %352 = vmatpush1.bf16.msra.mxu0 %v309
        %353 = vmatprep.subr.bf16.mxu0 0
        %354 = vmatpush1.bf16.msra.mxu0 %v308
        %355 = vmatprep.subr.bf16.mxu0 0
        %356 = vmatpush2.bf16.msra.mxu0 0
        %357 = vmatprep.subr.bf16.mxu0 0
        %358 = vmatpush2.bf16.msra.mxu0 0
        %359 = vmatprep.subr.bf16.mxu0 0
        %360 = vmatpush2.bf16.msra.mxu0 %v321
        %361 = vmatprep.subr.bf16.mxu0 0
        %362 = vmatpush2.bf16.msra.mxu0 %v320
        %363 = vmatprep.subr.bf16.mxu0 0
        %364 = vmatpush2.bf16.msra.mxu0 %v319
        %365 = vmatprep.subr.bf16.mxu0 0
        %366 = vmatpush2.bf16.msra.mxu0 %v318
        %367 = vmatprep.subr.bf16.mxu0 0
        %368 = vmatpush2.bf16.msra.mxu0 %v317
        %369 = vmatprep.subr.bf16.mxu0 0
        %370 = vmatpush2.bf16.msra.mxu0 %v316
        %371 = vmatprep.mubr.bf16.mxu0 %v337
        %372 = vmatmul.mubr.bf16.gmra.mxu0 %v222
        %v373 = vpop.f32.mrf.mxu0
        %v374 = vadd.f32 0.0, %v373
        %v375 = vpop.f32.mrf.mxu0
        %v376 = vpop.f32.mrf.mxu0
        %v377 = vpop.f32.mrf.mxu0
        %378 = vdwg.mxu0
        %379 = vst.msk [vmem:[%s161] sm:$0xff] %vm184, %v374
        %s380 = sand.u32 %s93, 1
        %s381 = scalar_lea.sflag [#allocation3], %s380
        %s382 = sand.u32 %s93, 1
        %s383 = smul.addr %s382, 8
        %s384 = scalar_lea.vmem [#allocation2], %s383
        // Predicated region
        $region33: #{tpu_custom_call.1} parent=31 // pred_check
          %p385 = pneg %p103
        $region34: #{tpu_custom_call.1} parent=31 // pred_check_branch
          %387 = sbr.rel (%p385) target = $region36
        $region35: #{tpu_custom_call.1} parent=31 // pred_region
          %s389 = ssub.s32 128, 128
          %390 = vsyncadd %s381, %s389
          %s391 = smul.addr %s17, 128
          %s392 = scalar_lea.hbm %s3, %s391
          %s394 = sshll.u32 %s384, 4
          %s395 = int_to_ptr.vmem [resolvable:$true] %s394
          %397 = dma.vmem_to_hbm [thread:$0]  %s395, 128, %s392, %s381
        $region36: #{tpu_custom_call.1} parent=31 // pred_fallthru
          _
      $region32: #{tpu_custom_call.1} parent=5 // pred_fallthru
        _
      %p398 = scmp.le.s32.totalorder 2, %s12
      // Predicated region
      $region37: #{tpu_custom_call.1} parent=5 // pred_check
        %p399 = pneg %p398
      $region38: #{tpu_custom_call.1} parent=5 // pred_check_branch
        %401 = sbr.rel (%p399) target = $region40
      $region39: #{tpu_custom_call.1} parent=5 // pred_region
        %s402 = ssub.s32 %s12, 2
        // Predicated region
        $region41: #{tpu_custom_call.1} parent=39 // pred_check
          %p403 = pneg %p109
        $region42: #{tpu_custom_call.1} parent=39 // pred_check_branch
          %405 = sbr.rel (%p403) target = $region44
        $region43: #{tpu_custom_call.1} parent=39 // pred_region
          %s406 = sand.u32 %s94, 1
          %s407 = scalar_lea.sflag [#allocation3], %s406
          %s408 = sand.u32 %s94, 1
          %s409 = smul.addr %s408, 8
          %s410 = scalar_lea.vmem [#allocation2], %s409
          %411 = dma.done %s407, 128
        $region44: #{tpu_custom_call.1} parent=39 // pred_fallthru
          _
      $region40: #{tpu_custom_call.1} parent=5 // pred_fallthru
        _
    $region6: #{tpu_custom_call.1} parent=1 // loop_footer
      %s16 = sadd.s32 1, %s12
    $region7: #{tpu_custom_call.1} parent=1 // loop_footer_branch
      %11 = sbr.rel target = $region3
    $region8: #{tpu_custom_call.1} parent=1 // loop_exit
      _
    %412 = vsyncpa [#allocation3], 1
    %s413 = scalar_lea.sflag [#allocation3], 1
    %414 = vsyncpa %s413, 1

</llo_original>
